<compile_context>
chip_gen: v7x
topology: tpu7x:2x2x1
jax: 0.10.0
libtpu: 0.0.40
codegen_flags: <defaults>
</compile_context>

<pallas_src>
import jax
import jax.numpy as jnp
from jax import lax
from jax.experimental import pallas as pl
from jax.experimental.pallas import tpu as pltpu


def _make_kernel(N, Cd, Cc, H, W, TH, NH, weight_dtype, has_tail):
    inv_hw = 1.0 / float(H * W)
    inv_count_x = 1.0 / float(N * Cd * H * (W - 1))
    inv_count_y = 1.0 / float(N * Cd * (H - 1) * W)

    def kernel(disp_ref, color_ref, out_ref,
               acc_disp, acc_x, acc_y, prev_d, prev_c):
        h = pl.program_id(1)

        # Disparity path stays f32 (mean normalization / accumulators); the
        # color (edge-weight) path stays in weight_dtype (bf16 on v6e/v7x).
        d = disp_ref[...].astype(jnp.float32)                       # (Cd,TH,W)
        c = color_ref[...]                                          # (Cc,TH,W)
        if c.dtype != weight_dtype:
            c = c.astype(weight_dtype)

        row = lax.broadcasted_iota(jnp.int32, (1, TH, W), 1)
        if has_tail:
            # Rows past H in the padded last slab hold unspecified data:
            # select them to zero so every downstream term vanishes.
            valid = row + h * TH < H
            d = jnp.where(valid, d, 0.0)
            c = jnp.where(valid, c, 0.0)

        @pl.when(h == 0)
        def _():
            acc_disp[...] = jnp.zeros_like(acc_disp)
            acc_x[...] = jnp.zeros_like(acc_x)
            acc_y[...] = jnp.zeros_like(acc_y)

        # ---- x direction: full-width shifted difference (lane roll).  The
        # wrapped pair (w=W-1 with w=0) lands entirely in lane W-1 of acc_x
        # and is subtracted once per image in the epilogue -> no per-step
        # iota / compare / select on this path.
        dx_d = jnp.abs(d - pltpu.roll(d, shift=W - 1, axis=2))      # (Cd,TH,W) f32
        dx_c = jnp.abs(c - pltpu.roll(c, shift=W - 1, axis=2))      # (Cc,TH,W) wdt
        wx = jnp.exp(-jnp.mean(dx_c, axis=0, keepdims=True))        # (1,TH,W) wdt
        acc_x[...] += jnp.sum(dx_d * wx, axis=1)                    # (Cd,W) f32

        # ---- y direction, within the slab (sublane roll).  Mask the wrapped
        # last row on the (1,TH,W) weight, not the (Cd,TH,W) product.
        dy_d = jnp.abs(d - pltpu.roll(d, shift=TH - 1, axis=1))
        dy_c = jnp.abs(c - pltpu.roll(c, shift=TH - 1, axis=1))
        wy = jnp.exp(-jnp.mean(dy_c, axis=0, keepdims=True))        # (1,TH,W)
        if has_tail:
            valid_y = jnp.logical_and(row < TH - 1, row + h * TH + 1 < H)
        else:
            valid_y = row < TH - 1
        wy = jnp.where(valid_y, wy, 0.0)
        acc_y[...] += jnp.sum(dy_d * wy, axis=1)                    # (Cd,W) f32

        # ---- y direction, slab boundary: carried last row of previous slab.
        @pl.when(h > 0)
        def _():
            db = jnp.abs(prev_d[...] - d[:, 0:1, :])                # (Cd,1,W)
            cb = jnp.abs(prev_c[...] - c[:, 0:1, :])                # (Cc,1,W)
            wb = jnp.exp(-jnp.mean(cb, axis=0, keepdims=True))      # (1,1,W)
            acc_y[...] += jnp.sum(db * wb, axis=1)                  # (Cd,W)

        # Running per-channel disparity sum (for the mean normalization).
        acc_disp[...] += jnp.sum(d, axis=1)                         # (Cd,W)

        # Carry this slab's last row into the next grid step.
        prev_d[...] = d[:, TH - 1:TH, :]
        prev_c[...] = c[:, TH - 1:TH, :]

        # ---- per-image finalize: apply 1/|mean_disp + eps|, global averaging,
        # and write this image's partial loss (batch axis is "parallel").
        @pl.when(h == NH - 1)
        def _():
            sum_d = jnp.sum(acc_disp[...], axis=1, keepdims=True)   # (Cd,1)
            inv_m = 1.0 / jnp.abs(sum_d * inv_hw + 1e-5)
            sx = (jnp.sum(acc_x[...], axis=1, keepdims=True)
                  - acc_x[:, W - 1:W]) * inv_m                      # drop wrap col
            sy = jnp.sum(acc_y[...], axis=1, keepdims=True) * inv_m
            contrib = (jnp.sum(sx, keepdims=True) * inv_count_x
                       + jnp.sum(sy, keepdims=True) * inv_count_y)  # (1,1)
            out_ref[...] = contrib

    return kernel


def _vmem_capacity_bytes():
    try:
        info = pltpu.get_tpu_info()
        for attr in ("vmem_capacity_bytes", "vmem_bytes", "vmem_size_bytes"):
            v = getattr(info, attr, None)
            if v:
                return int(v)
    except Exception:
        pass
    return 64 << 20   # v7x-safe fallback (smallest physical VMEM in the fleet)


def _is_pre_v6_tpu():
    # v5e and older have no bf16 VPU/EUP -> keep the weight path in f32 there.
    try:
        kind = jax.devices()[0].device_kind.lower()
    except Exception:
        return False
    return any(t in kind for t in ("v2", "v3", "v4", "v5"))


def _pick_block_rows(H, row_bytes, budget_bytes):
    """Largest row-slab (multiple of 8) whose working set fits the VMEM budget,
    preferring an exact divisor of H; otherwise the last slab is mask-padded."""
    if H <= 8:
        return H
    cap = max(8, min((budget_bytes // max(row_bytes, 1)) // 8 * 8,
                     (H // 8) * 8, 1024))
    for th in range(int(cap), 7, -8):
        if H % th == 0:
            return th
    return int(cap)          # masked-tail fallback (grid = cdiv(H, TH))


def smooth_loss(disp, color, *, block_rows=None, color_dtype=jnp.bfloat16,
                weight_dtype=None):
    """disp: (N, Cd, H, W), color: (N, Cc, H, W) -> scalar loss (float32).

    color_dtype:  storage dtype used to stream the color image from HBM
                  (bf16 default -> ~37% less HBM traffic; None keeps as-is).
    weight_dtype: compute dtype of the edge-weight (color) path.  Defaults to
                  the color dtype on bf16-capable VPUs (v6e/v7x) and f32 on
                  v5e and older.
    """
    N, Cd, H, W = disp.shape
    Nc, Cc, Hc, Wc = color.shape
    assert (N, H, W) == (Nc, Hc, Wc), "disp / color spatial shapes must match"
    assert H >= 2 and W >= 2

    if color_dtype is not None and color.dtype != jnp.dtype(color_dtype):
        color = color.astype(color_dtype)
    if weight_dtype is None:
        weight_dtype = jnp.float32 if _is_pre_v6_tpu() else color.dtype
    weight_dtype = jnp.dtype(weight_dtype)

    disp_it = jnp.dtype(disp.dtype).itemsize
    col_it = jnp.dtype(color.dtype).itemsize
    w_it = weight_dtype.itemsize

    # Per-row-of-slab VMEM footprint: 2x double-buffered input slabs plus the
    # f32 / weight-dtype temporaries the body materializes.
    row_bytes = (2 * (Cd * disp_it + Cc * col_it) * W
                 + (4 * Cd + 2) * 4 * W
                 + (3 * Cc + 2) * w_it * W)
    vmem_cap = _vmem_capacity_bytes()
    budget = max(vmem_cap // 2 - (2 << 20), 4 << 20)

    if block_rows is None:
        TH = _pick_block_rows(H, row_bytes, budget)
    else:
        TH = int(block_rows)
        assert TH == H or (TH % 8 == 0 and TH <= H), \
            "block_rows must be a multiple of 8 (or equal to H)"
    NH = int(pl.cdiv(H, TH))
    has_tail = (H % TH) != 0

    kernel = _make_kernel(N, Cd, Cc, H, W, TH, NH, weight_dtype, has_tail)

    est = row_bytes * TH + (4 * Cd * 4 + Cc * w_it) * W + (1 << 20)
    vmem_limit = int(min(max(2 * est, 16 << 20), (vmem_cap * 3) // 4))

    cost = pl.CostEstimate(
        flops=int((8 * (Cd + Cc) + 8) * N * H * W),
        transcendentals=int(2 * N * H * W),
        bytes_accessed=int(disp.size * disp_it + color.size * col_it + N * 4),
    )

    out = pl.pallas_call(
        kernel,
        out_shape=jax.ShapeDtypeStruct((N, 1, 1), jnp.float32),
        grid_spec=pltpu.PrefetchScalarGridSpec(
            num_scalar_prefetch=0,
            grid=(N, NH),
            in_specs=[
                pl.BlockSpec((None, Cd, TH, W), lambda n, h: (n, 0, h, 0)),
                pl.BlockSpec((None, Cc, TH, W), lambda n, h: (n, 0, h, 0)),
            ],
            out_specs=pl.BlockSpec((None, 1, 1), lambda n, h: (n, 0, 0)),
            scratch_shapes=[
                pltpu.VMEM((Cd, W), jnp.float32),        # acc_disp
                pltpu.VMEM((Cd, W), jnp.float32),        # acc_x
                pltpu.VMEM((Cd, W), jnp.float32),        # acc_y
                pltpu.VMEM((Cd, 1, W), jnp.float32),     # prev slab last row (disp)
                pltpu.VMEM((Cc, 1, W), weight_dtype),    # prev slab last row (color)
            ],
        ),
        compiler_params=pltpu.CompilerParams(
            # Per-image outputs make the batch axis independent -> shard it
            # across TensorCores (v7x megacore).  The row-slab axis carries
            # accumulator / carried-row state, so it stays "arbitrary".
            dimension_semantics=("parallel", "arbitrary"),
            vmem_limit_bytes=vmem_limit,
        ),
        cost_estimate=cost,
    )(disp, color)
    return jnp.sum(out[:, 0, 0])


def _smooth_loss_ref(disp, color):
    # Pure-JAX reference mirroring the PyTorch SmoothLoss module.
    mean_disp = jnp.mean(disp, axis=(2, 3), keepdims=True)
    norm_disp = disp / (mean_disp + 1e-5)
    gdx = jnp.abs(norm_disp[:, :, :, :-1] - norm_disp[:, :, :, 1:])
    gdy = jnp.abs(norm_disp[:, :, :-1, :] - norm_disp[:, :, 1:, :])
    gix = jnp.mean(jnp.abs(color[:, :, :, :-1] - color[:, :, :, 1:]),
                   axis=1, keepdims=True)
    giy = jnp.mean(jnp.abs(color[:, :, :-1, :] - color[:, :, 1:, :]),
                   axis=1, keepdims=True)
    gdx = gdx * jnp.exp(-gix)
    gdy = gdy * jnp.exp(-giy)
    return jnp.mean(gdx) + jnp.mean(gdy)


if __name__ == "__main__":
    key = jax.random.PRNGKey(0)
    k1, k2, k3, k4 = jax.random.split(key, 4)

    # disparity: (N=2, C=1, H=16, W=16), positive values; color: (N=2, C=3, H, W)
    disp = jax.random.uniform(k1, (2, 1, 16, 16), jnp.float32,
                              minval=0.1, maxval=1.0)
    color = jax.random.uniform(k2, (2, 3, 16, 16), jnp.float32)
    ref = _smooth_loss_ref(disp, color)

    # 1) Full-f32 path, block_rows=8 -> exercises the multi-slab carry path;
    #    tight tolerance (bit-level semantics of the module).
    loss_f32 = smooth_loss(disp, color, block_rows=8,
                           color_dtype=None, weight_dtype=jnp.float32)
    jax.block_until_ready(loss_f32)
    assert abs(float(loss_f32) - float(ref)) < 1e-5 + 1e-4 * abs(float(ref)), (
        float(loss_f32), float(ref))

    # 2) Default fast path (bf16 color stream + hw-gated bf16 weight path,
    #    auto row-slab); edge weights lose ~3 decimal digits -> looser tol.
    loss_fast = smooth_loss(disp, color)
    jax.block_until_ready(loss_fast)
    assert abs(float(loss_fast) - float(ref)) < 1e-3 + 1e-2 * abs(float(ref)), (
        float(loss_fast), float(ref))

    # 3) Awkward H (masked-tail slab) and Cd > 1, f32 path, tight tolerance.
    disp3 = jax.random.uniform(k3, (2, 2, 20, 16), jnp.float32,
                               minval=0.1, maxval=1.0)
    color3 = jax.random.uniform(k4, (2, 3, 20, 16), jnp.float32)
    loss3 = smooth_loss(disp3, color3, block_rows=8,
                        color_dtype=None, weight_dtype=jnp.float32)
    jax.block_until_ready(loss3)
    ref3 = _smooth_loss_ref(disp3, color3)
    assert abs(float(loss3) - float(ref3)) < 1e-5 + 1e-4 * abs(float(ref3)), (
        float(loss3), float(ref3))

    print("KERNEL_OK")
</pallas_src>

<mosaic_0001>
module attributes {stable_mosaic.version = 11 : i64} {
  func.func @kernel(%arg0: i32, %arg1: i32, %arg2: memref<1x1x8x16xf32, #tpu.memory_space<vmem>>, %arg3: memref<1x3x8x16xf32, #tpu.memory_space<vmem>>, %arg4: memref<1x1x1xf32, #tpu.memory_space<vmem>>, %arg5: memref<1x16xf32, #tpu.memory_space<vmem>>, %arg6: memref<1x16xf32, #tpu.memory_space<vmem>>, %arg7: memref<1x16xf32, #tpu.memory_space<vmem>>, %arg8: memref<1x1x16xf32, #tpu.memory_space<vmem>>, %arg9: memref<3x1x16xf32, #tpu.memory_space<vmem>>) attributes {dimension_semantics = [#tpu.dimension_semantics<parallel>, #tpu.dimension_semantics<arbitrary>], iteration_bounds = array<i64: 2, 2>, scalar_prefetch = 0 : i64, scratch_operands = 5 : i64, tpu.core_type = #tpu.core_type<tc>, window_params = [{transform_indices = @transform_0, window_bounds = array<i64: 1, 1, 8, 16>}, {transform_indices = @transform_1, window_bounds = array<i64: 1, 3, 8, 16>}, {transform_indices = @transform_2, window_bounds = array<i64: 1, 1, 1>}]} {
    %c0 = arith.constant 0 : index
    %c0_0 = arith.constant 0 : index
    %c0_1 = arith.constant 0 : index
    %c0_2 = arith.constant 0 : index
    %0 = vector.load %arg2[%c0, %c0_0, %c0_1, %c0_2] : memref<1x1x8x16xf32, #tpu.memory_space<vmem>>, vector<1x1x8x16xf32>
    %1 = vector.shape_cast %0 : vector<1x1x8x16xf32> to vector<1x8x16xf32>
    %c0_3 = arith.constant 0 : index
    %c0_4 = arith.constant 0 : index
    %c0_5 = arith.constant 0 : index
    %c0_6 = arith.constant 0 : index
    %2 = vector.load %arg3[%c0_3, %c0_4, %c0_5, %c0_6] : memref<1x3x8x16xf32, #tpu.memory_space<vmem>>, vector<1x3x8x16xf32>
    %3 = vector.shape_cast %2 : vector<1x3x8x16xf32> to vector<3x8x16xf32>
    %4 = tpu.iota {dimensions = array<i32: 1>} : vector<1x8x16xi32>
    %c0_i32 = arith.constant 0 : i32
    %5 = arith.cmpi eq, %arg1, %c0_i32 : i32
    %6 = arith.extui %5 : i1 to i32
    %c0_i32_7 = arith.constant 0 : i32
    %7 = arith.cmpi ne, %6, %c0_i32_7 : i32
    scf.if %7 {
      %cst_41 = arith.constant 0.000000e+00 : f32
      %62 = vector.broadcast %cst_41 : f32 to vector<1x16xf32>
      %c0_42 = arith.constant 0 : index
      %c0_43 = arith.constant 0 : index
      %63 = vector.load %arg5[%c0_42, %c0_43] : memref<1x16xf32, #tpu.memory_space<vmem>>, vector<1x16xf32>
      tpu.vector_store %arg5[%c0_42, %c0_43], %62 {strides = array<i32>} : memref<1x16xf32, #tpu.memory_space<vmem>>, vector<1x16xf32>,
      %cst_44 = arith.constant 0.000000e+00 : f32
      %64 = vector.broadcast %cst_44 : f32 to vector<1x16xf32>
      %c0_45 = arith.constant 0 : index
      %c0_46 = arith.constant 0 : index
      %65 = vector.load %arg6[%c0_45, %c0_46] : memref<1x16xf32, #tpu.memory_space<vmem>>, vector<1x16xf32>
      tpu.vector_store %arg6[%c0_45, %c0_46], %64 {strides = array<i32>} : memref<1x16xf32, #tpu.memory_space<vmem>>, vector<1x16xf32>,
      %cst_47 = arith.constant 0.000000e+00 : f32
      %66 = vector.broadcast %cst_47 : f32 to vector<1x16xf32>
      %c0_48 = arith.constant 0 : index
      %c0_49 = arith.constant 0 : index
      %67 = vector.load %arg7[%c0_48, %c0_49] : memref<1x16xf32, #tpu.memory_space<vmem>>, vector<1x16xf32>
      tpu.vector_store %arg7[%c0_48, %c0_49], %66 {strides = array<i32>} : memref<1x16xf32, #tpu.memory_space<vmem>>, vector<1x16xf32>,
    } else {
    }
    %c15_i32 = arith.constant 15 : i32
    %8 = tpu.dynamic_rotate %1 by %c15_i32 dim 2 : vector<1x8x16xf32>, i32 -> vector<1x8x16xf32>
    %9 = arith.subf %1, %8 : vector<1x8x16xf32>
    %10 = math.absf %9 : vector<1x8x16xf32>
    %c15_i32_8 = arith.constant 15 : i32
    %11 = tpu.dynamic_rotate %3 by %c15_i32_8 dim 2 : vector<3x8x16xf32>, i32 -> vector<3x8x16xf32>
    %12 = arith.subf %3, %11 : vector<3x8x16xf32>
    %13 = math.absf %12 : vector<3x8x16xf32>
    %cst = arith.constant dense<0.000000e+00> : vector<8x16xf32>
    %14 = vector.multi_reduction <add>, %13, %cst [0] : vector<3x8x16xf32> to vector<8x16xf32>
    %15 = vector.shape_cast %14 : vector<8x16xf32> to vector<1x8x16xf32>
    %cst_9 = arith.constant 3.000000e+00 : f32
    %16 = vector.broadcast %cst_9 : f32 to vector<1x8x16xf32>
    %17 = arith.divf %15, %16 : vector<1x8x16xf32>
    %cst_10 = arith.constant 0.000000e+00 : f32
    %18 = vector.broadcast %cst_10 : f32 to vector<1x8x16xf32>
    %19 = arith.subf %18, %17 : vector<1x8x16xf32>
    %20 = math.exp %19 : vector<1x8x16xf32>
    %c0_11 = arith.constant 0 : index
    %c0_12 = arith.constant 0 : index
    %21 = vector.load %arg6[%c0_11, %c0_12] : memref<1x16xf32, #tpu.memory_space<vmem>>, vector<1x16xf32>
    %22 = arith.mulf %10, %20 : vector<1x8x16xf32>
    %cst_13 = arith.constant dense<0.000000e+00> : vector<1x16xf32>
    %23 = vector.multi_reduction <add>, %22, %cst_13 [1] : vector<1x8x16xf32> to vector<1x16xf32>
    %24 = arith.addf %21, %23 : vector<1x16xf32>
    %c0_14 = arith.constant 0 : index
    %c0_15 = arith.constant 0 : index
    %25 = vector.load %arg6[%c0_14, %c0_15] : memref<1x16xf32, #tpu.memory_space<vmem>>, vector<1x16xf32>
    tpu.vector_store %arg6[%c0_14, %c0_15], %24 {strides = array<i32>} : memref<1x16xf32, #tpu.memory_space<vmem>>, vector<1x16xf32>,
    %c7_i32 = arith.constant 7 : i32
    %26 = tpu.dynamic_rotate %1 by %c7_i32 dim 1 : vector<1x8x16xf32>, i32 -> vector<1x8x16xf32>
    %27 = arith.subf %1, %26 : vector<1x8x16xf32>
    %28 = math.absf %27 : vector<1x8x16xf32>
    %c7_i32_16 = arith.constant 7 : i32
    %29 = tpu.dynamic_rotate %3 by %c7_i32_16 dim 1 : vector<3x8x16xf32>, i32 -> vector<3x8x16xf32>
    %30 = arith.subf %3, %29 : vector<3x8x16xf32>
    %31 = math.absf %30 : vector<3x8x16xf32>
    %cst_17 = arith.constant dense<0.000000e+00> : vector<8x16xf32>
    %32 = vector.multi_reduction <add>, %31, %cst_17 [0] : vector<3x8x16xf32> to vector<8x16xf32>
    %33 = vector.shape_cast %32 : vector<8x16xf32> to vector<1x8x16xf32>
    %cst_18 = arith.constant 3.000000e+00 : f32
    %34 = vector.broadcast %cst_18 : f32 to vector<1x8x16xf32>
    %35 = arith.divf %33, %34 : vector<1x8x16xf32>
    %cst_19 = arith.constant 0.000000e+00 : f32
    %36 = vector.broadcast %cst_19 : f32 to vector<1x8x16xf32>
    %37 = arith.subf %36, %35 : vector<1x8x16xf32>
    %38 = math.exp %37 : vector<1x8x16xf32>
    %c7_i32_20 = arith.constant 7 : i32
    %39 = vector.broadcast %c7_i32_20 : i32 to vector<1x8x16xi32>
    %40 = arith.cmpi slt, %4, %39 : vector<1x8x16xi32>
    %cst_21 = arith.constant 0.000000e+00 : f32
    %41 = vector.broadcast %cst_21 : f32 to vector<1x8x16xf32>
    %42 = arith.select %40, %38, %41 : vector<1x8x16xi1>, vector<1x8x16xf32>
    %c0_22 = arith.constant 0 : index
    %c0_23 = arith.constant 0 : index
    %43 = vector.load %arg7[%c0_22, %c0_23] : memref<1x16xf32, #tpu.memory_space<vmem>>, vector<1x16xf32>
    %44 = arith.mulf %28, %42 : vector<1x8x16xf32>
    %cst_24 = arith.constant dense<0.000000e+00> : vector<1x16xf32>
    %45 = vector.multi_reduction <add>, %44, %cst_24 [1] : vector<1x8x16xf32> to vector<1x16xf32>
    %46 = arith.addf %43, %45 : vector<1x16xf32>
    %c0_25 = arith.constant 0 : index
    %c0_26 = arith.constant 0 : index
    %47 = vector.load %arg7[%c0_25, %c0_26] : memref<1x16xf32, #tpu.memory_space<vmem>>, vector<1x16xf32>
    tpu.vector_store %arg7[%c0_25, %c0_26], %46 {strides = array<i32>} : memref<1x16xf32, #tpu.memory_space<vmem>>, vector<1x16xf32>,
    %c0_i32_27 = arith.constant 0 : i32
    %48 = arith.cmpi sgt, %arg1, %c0_i32_27 : i32
    %49 = arith.extui %48 : i1 to i32
    %c0_i32_28 = arith.constant 0 : i32
    %50 = arith.cmpi ne, %49, %c0_i32_28 : i32
    scf.if %50 {
      %c0_41 = arith.constant 0 : index
      %c0_42 = arith.constant 0 : index
      %c0_43 = arith.constant 0 : index
      %62 = vector.load %arg8[%c0_41, %c0_42, %c0_43] : memref<1x1x16xf32, #tpu.memory_space<vmem>>, vector<1x1x16xf32>
      %63 = vector.extract_strided_slice %1 {offsets = [0, 0, 0], sizes = [1, 1, 16], strides = [1, 1, 1]} : vector<1x8x16xf32> to vector<1x1x16xf32>
      %64 = arith.subf %62, %63 : vector<1x1x16xf32>
      %65 = math.absf %64 : vector<1x1x16xf32>
      %c0_44 = arith.constant 0 : index
      %c0_45 = arith.constant 0 : index
      %c0_46 = arith.constant 0 : index
      %66 = vector.load %arg9[%c0_44, %c0_45, %c0_46] : memref<3x1x16xf32, #tpu.memory_space<vmem>>, vector<3x1x16xf32>
      %67 = vector.extract_strided_slice %3 {offsets = [0, 0, 0], sizes = [3, 1, 16], strides = [1, 1, 1]} : vector<3x8x16xf32> to vector<3x1x16xf32>
      %68 = arith.subf %66, %67 : vector<3x1x16xf32>
      %69 = math.absf %68 : vector<3x1x16xf32>
      %cst_47 = arith.constant dense<0.000000e+00> : vector<1x16xf32>
      %70 = vector.multi_reduction <add>, %69, %cst_47 [0] : vector<3x1x16xf32> to vector<1x16xf32>
      %71 = vector.shape_cast %70 : vector<1x16xf32> to vector<1x1x16xf32>
      %cst_48 = arith.constant 3.000000e+00 : f32
      %72 = vector.broadcast %cst_48 : f32 to vector<1x1x16xf32>
      %73 = arith.divf %71, %72 : vector<1x1x16xf32>
      %cst_49 = arith.constant 0.000000e+00 : f32
      %74 = vector.broadcast %cst_49 : f32 to vector<1x1x16xf32>
      %75 = arith.subf %74, %73 : vector<1x1x16xf32>
      %76 = math.exp %75 : vector<1x1x16xf32>
      %c0_50 = arith.constant 0 : index
      %c0_51 = arith.constant 0 : index
      %77 = vector.load %arg7[%c0_50, %c0_51] : memref<1x16xf32, #tpu.memory_space<vmem>>, vector<1x16xf32>
      %78 = arith.mulf %65, %76 : vector<1x1x16xf32>
      %cst_52 = arith.constant dense<0.000000e+00> : vector<1x16xf32>
      %79 = vector.multi_reduction <add>, %78, %cst_52 [1] : vector<1x1x16xf32> to vector<1x16xf32>
      %80 = arith.addf %77, %79 : vector<1x16xf32>
      %c0_53 = arith.constant 0 : index
      %c0_54 = arith.constant 0 : index
      %81 = vector.load %arg7[%c0_53, %c0_54] : memref<1x16xf32, #tpu.memory_space<vmem>>, vector<1x16xf32>
      tpu.vector_store %arg7[%c0_53, %c0_54], %80 {strides = array<i32>} : memref<1x16xf32, #tpu.memory_space<vmem>>, vector<1x16xf32>,
    } else {
    }
    %c0_29 = arith.constant 0 : index
    %c0_30 = arith.constant 0 : index
    %51 = vector.load %arg5[%c0_29, %c0_30] : memref<1x16xf32, #tpu.memory_space<vmem>>, vector<1x16xf32>
    %cst_31 = arith.constant dense<0.000000e+00> : vector<1x16xf32>
    %52 = vector.multi_reduction <add>, %1, %cst_31 [1] : vector<1x8x16xf32> to vector<1x16xf32>
    %53 = arith.addf %51, %52 : vector<1x16xf32>
    %c0_32 = arith.constant 0 : index
    %c0_33 = arith.constant 0 : index
    %54 = vector.load %arg5[%c0_32, %c0_33] : memref<1x16xf32, #tpu.memory_space<vmem>>, vector<1x16xf32>
    tpu.vector_store %arg5[%c0_32, %c0_33], %53 {strides = array<i32>} : memref<1x16xf32, #tpu.memory_space<vmem>>, vector<1x16xf32>,
    %55 = vector.extract_strided_slice %1 {offsets = [0, 7, 0], sizes = [1, 1, 16], strides = [1, 1, 1]} : vector<1x8x16xf32> to vector<1x1x16xf32>
    %c0_34 = arith.constant 0 : index
    %c0_35 = arith.constant 0 : index
    %c0_36 = arith.constant 0 : index
    %56 = vector.load %arg8[%c0_34, %c0_35, %c0_36] : memref<1x1x16xf32, #tpu.memory_space<vmem>>, vector<1x1x16xf32>
    tpu.vector_store %arg8[%c0_34, %c0_35, %c0_36], %55 {strides = array<i32>} : memref<1x1x16xf32, #tpu.memory_space<vmem>>, vector<1x1x16xf32>,
    %57 = vector.extract_strided_slice %3 {offsets = [0, 7, 0], sizes = [3, 1, 16], strides = [1, 1, 1]} : vector<3x8x16xf32> to vector<3x1x16xf32>
    %c0_37 = arith.constant 0 : index
    %c0_38 = arith.constant 0 : index
    %c0_39 = arith.constant 0 : index
    %58 = vector.load %arg9[%c0_37, %c0_38, %c0_39] : memref<3x1x16xf32, #tpu.memory_space<vmem>>, vector<3x1x16xf32>
    tpu.vector_store %arg9[%c0_37, %c0_38, %c0_39], %57 {strides = array<i32>} : memref<3x1x16xf32, #tpu.memory_space<vmem>>, vector<3x1x16xf32>,
    %c1_i32 = arith.constant 1 : i32
    %59 = arith.cmpi eq, %arg1, %c1_i32 : i32
    %60 = arith.extui %59 : i1 to i32
    %c0_i32_40 = arith.constant 0 : i32
    %61 = arith.cmpi ne, %60, %c0_i32_40 : i32
    scf.if %61 {
      %c0_41 = arith.constant 0 : index
      %c0_42 = arith.constant 0 : index
      %62 = vector.load %arg5[%c0_41, %c0_42] : memref<1x16xf32, #tpu.memory_space<vmem>>, vector<1x16xf32>
      %cst_43 = arith.constant dense<0.000000e+00> : vector<1xf32>
      %63 = vector.multi_reduction <add>, %62, %cst_43 [1] : vector<1x16xf32> to vector<1xf32>
      %64 = vector.shape_cast %63 : vector<1xf32> to vector<1x1xf32>
      %cst_44 = arith.constant 3.906250e-03 : f32
      %65 = vector.broadcast %cst_44 : f32 to vector<1x1xf32>
      %66 = arith.mulf %64, %65 : vector<1x1xf32>
      %cst_45 = arith.constant 9.99999974E-6 : f32
      %67 = vector.broadcast %cst_45 : f32 to vector<1x1xf32>
      %68 = arith.addf %66, %67 : vector<1x1xf32>
      %69 = math.absf %68 : vector<1x1xf32>
      %cst_46 = arith.constant 1.000000e+00 : f32
      %70 = vector.broadcast %cst_46 : f32 to vector<1x1xf32>
      %71 = arith.divf %70, %69 : vector<1x1xf32>
      %c0_47 = arith.constant 0 : index
      %c0_48 = arith.constant 0 : index
      %72 = vector.load %arg6[%c0_47, %c0_48] : memref<1x16xf32, #tpu.memory_space<vmem>>, vector<1x16xf32>
      %cst_49 = arith.constant dense<0.000000e+00> : vector<1xf32>
      %73 = vector.multi_reduction <add>, %72, %cst_49 [1] : vector<1x16xf32> to vector<1xf32>
      %74 = vector.shape_cast %73 : vector<1xf32> to vector<1x1xf32>
      %c0_50 = arith.constant 0 : index
      %c15 = arith.constant 15 : index
      %75 = vector.load %arg6[%c0_50, %c15] : memref<1x16xf32, #tpu.memory_space<vmem>>, vector<1x1xf32>
      %76 = arith.subf %74, %75 : vector<1x1xf32>
      %77 = arith.mulf %76, %71 : vector<1x1xf32>
      %c0_51 = arith.constant 0 : index
      %c0_52 = arith.constant 0 : index
      %78 = vector.load %arg7[%c0_51, %c0_52] : memref<1x16xf32, #tpu.memory_space<vmem>>, vector<1x16xf32>
      %cst_53 = arith.constant dense<0.000000e+00> : vector<1xf32>
      %79 = vector.multi_reduction <add>, %78, %cst_53 [1] : vector<1x16xf32> to vector<1xf32>
      %80 = vector.shape_cast %79 : vector<1xf32> to vector<1x1xf32>
      %81 = arith.mulf %80, %71 : vector<1x1xf32>
      %82 = vector.shape_cast %77 : vector<1x1xf32> to vector<1x1x1xf32>
      %cst_54 = arith.constant dense<0.000000e+00> : vector<1xf32>
      %83 = vector.multi_reduction <add>, %82, %cst_54 [1, 2] : vector<1x1x1xf32> to vector<1xf32>
      %84 = vector.shape_cast %83 : vector<1xf32> to vector<1x1x1xf32>
      %85 = vector.extract %84[0, 0, 0] : f32 from vector<1x1x1xf32>
      %86 = vector.broadcast %85 : f32 to vector<1x1xf32>
      %cst_55 = arith.constant 0.00208333344 : f32
      %87 = vector.broadcast %cst_55 : f32 to vector<1x1xf32>
      %88 = arith.mulf %86, %87 : vector<1x1xf32>
      %89 = vector.shape_cast %81 : vector<1x1xf32> to vector<1x1x1xf32>
      %cst_56 = arith.constant dense<0.000000e+00> : vector<1xf32>
      %90 = vector.multi_reduction <add>, %89, %cst_56 [1, 2] : vector<1x1x1xf32> to vector<1xf32>
      %91 = vector.shape_cast %90 : vector<1xf32> to vector<1x1x1xf32>
      %92 = vector.extract %91[0, 0, 0] : f32 from vector<1x1x1xf32>
      %93 = vector.broadcast %92 : f32 to vector<1x1xf32>
      %cst_57 = arith.constant 0.00208333344 : f32
      %94 = vector.broadcast %cst_57 : f32 to vector<1x1xf32>
      %95 = arith.mulf %93, %94 : vector<1x1xf32>
      %96 = arith.addf %88, %95 : vector<1x1xf32>
      %c0_58 = arith.constant 0 : index
      %c0_59 = arith.constant 0 : index
      %c0_60 = arith.constant 0 : index
      %97 = vector.load %arg4[%c0_58, %c0_59, %c0_60] : memref<1x1x1xf32, #tpu.memory_space<vmem>>, vector<1x1x1xf32>
      %98 = vector.shape_cast %97 : vector<1x1x1xf32> to vector<1x1xf32>
      %99 = vector.shape_cast %96 : vector<1x1xf32> to vector<1x1x1xf32>
      tpu.vector_store %arg4[%c0_58, %c0_59, %c0_60], %99 {strides = array<i32>} : memref<1x1x1xf32, #tpu.memory_space<vmem>>, vector<1x1x1xf32>,
    } else {
    }
    return
  }
  func.func @transform_0(%arg0: i32, %arg1: i32) -> (i32, i32, i32, i32) {
    %c0_i32 = arith.constant 0 : i32
    %c0_i32_0 = arith.constant 0 : i32
    %c0_i32_1 = arith.constant 0 : i32
    return %arg0, %c0_i32, %arg1, %c0_i32_0 : i32, i32, i32, i32
  }
  func.func @transform_1(%arg0: i32, %arg1: i32) -> (i32, i32, i32, i32) {
    %c0_i32 = arith.constant 0 : i32
    %c0_i32_0 = arith.constant 0 : i32
    %c0_i32_1 = arith.constant 0 : i32
    return %arg0, %c0_i32, %arg1, %c0_i32_0 : i32, i32, i32, i32
  }
  func.func @transform_2(%arg0: i32, %arg1: i32) -> (i32, i32, i32) {
    %c0_i32 = arith.constant 0 : i32
    %c0_i32_0 = arith.constant 0 : i32
    %c0_i32_1 = arith.constant 0 : i32
    return %arg0, %c0_i32, %c0_i32_0 : i32, i32, i32
  }
}

</mosaic_0001>

<llo_original>
// kernel: tpu_custom_call.1
$region0: #{tpu_custom_call.1}
  #allocation0 [shape = 'u32[]', space=smem, size = 0x4, offset = 0x4, fixed_abs, tag = 'smem constant byte address 0x4 - core index']
  #allocation1 [shape = 'u32[144,128]{1,0:T(1,128)}', space=vmem, size = 0x12000, scoped, tag = 'internal scratch']
  #allocation2 [shape = 'f32[1,16]{1,0:T(1,128)}', space=vmem, size = 0x200, scoped, tag = 'scratch operand']
  #allocation3 [shape = 'f32[1,16]{1,0:T(1,128)}', space=vmem, size = 0x200, scoped, tag = 'scratch operand']
  #allocation4 [shape = 'f32[1,16]{1,0:T(1,128)}', space=vmem, size = 0x200, scoped, tag = 'scratch operand']
  #allocation5 [shape = 'f32[1,1,16]{2,1,0:T(1,128)}', space=vmem, size = 0x200, scoped, tag = 'scratch operand']
  #allocation6 [shape = 'f32[3,1,16]{2,1,0:T(1,128)}', space=vmem, size = 0x600, scoped, tag = 'scratch operand']
  %s0 = inlined_call_operand.hbm [shape: f32[2,1,16,16], index: 0, kind: input, shape index: {}]
  %s1 = inlined_call_operand.hbm [shape: f32[2,3,16,16], index: 1, kind: input, shape index: {}]
  %s2 = inlined_call_operand.vmem [shape: f32[2,1,1], index: 2, kind: output, shape index: {}]
  %s3 = sld [smem:[#allocation0]]
  $region61: #{tpu_custom_call.1} parent=0
    _
  %s5 = ssub.s32 1, %s3
  %s6 = scalar_select 0, %s5, %s3
  $region1: #{tpu_custom_call.1} parent=0
    #allocation7 [shape = 'u8[8192]{0}', space=vmem, size = 0x2000, scoped, tag = 'input window, operand 0']
    #allocation8 [shape = 's32[2]{0}', space=sflag, size = 0x8, scoped, tag = 'scoped memory for tpu_custom_call.1']
    #allocation9 [shape = 'u8[24576]{0}', space=vmem, size = 0x6000, scoped, tag = 'input window, operand 1']
    #allocation10 [shape = 's32[2]{0}', space=sflag, size = 0x8, scoped, tag = 'scoped memory for tpu_custom_call.1']
    %7 = vsyncpa [#allocation8], 0
    %s8 = scalar_lea.sflag [#allocation8], 1
    %9 = vsyncpa %s8, 0
    %10 = vsyncpa [#allocation10], 0
    %s11 = scalar_lea.sflag [#allocation10], 1
    %12 = vsyncpa %s11, 0
    loop: start=0, step=1, limit=6
    $region2: #{tpu_custom_call.1} parent=1 // loop_pre_header
      _
    $region3: #{tpu_custom_call.1} parent=1 // loop_header
      %s14 = sphi 0, %s18
      %p15 = scmp.ge.s32.totalorder %s14, 6
      %s21 = sphi 0, %s33
      %s22 = sphi 0, %s29
      %s23 = sphi 0, %s21
      %s24 = sphi 0, %s22
      %s25 = sphi 0, %s23
      %s26 = sphi 0, %s24
      %s38 = sphi 0, %s40
      %s41 = sphi 0, %s38
      %s42 = sphi 0, %s41
      %s58 = sphi 0, %s42
      %s66 = sphi 0, %s68
      %s69 = sphi 0, %s66
      %s70 = sphi 0, %s69
      %s86 = sphi 0, %s70
      %s92 = sphi 0, %s94
      %s95 = sphi 0, %s92
      %s96 = sphi 0, %s95
      %s112 = sphi 0, %s96
    $region4: #{tpu_custom_call.1} parent=1 // loop_header_branch
      %17 = sbr.rel (%p15) target = $region8
    $region5: #{tpu_custom_call.1} parent=1 // loop_body
      %s19 = ssub.s32 %s14, 1
      %s20 = ssub.s32 %s14, 2
      %s27 = sadd.s32 1, %s22
      %p28 = scmp.ge.s32.totalorder %s27, 2
      %s29 = scalar_select %p28, 0, %s27
      %s30 = sadd.s32 1, %s21
      %s31 = scalar_select %p28, %s30, %s21
      %p32 = scmp.ge.s32.totalorder %s31, 2
      %s33 = scalar_select %p32, 0, %s31
      %s34 = ssub.s32 %s21, %s33
      %s35 = ssub.s32 %s22, %s29
      %s36 = sor.u32 %s34, %s35
      %p37 = scmp.eq.s32.totalorder %s36, 0
      %s39 = sadd.s32 %s38, 1
      %s40 = scalar_select %p37, %s38, %s39
      %p43 = pneg %p37
      %p44 = scmp.eq.s32.totalorder %s14, 3
      %p45 = por %p43, %p44
      %p46 = scmp.ne.s32.totalorder %s38, %s41
      %p47 = scmp.eq.s32.totalorder %s14, 0
      %p48 = por %p46, %p47
      %p49 = scmp.ne.s32.totalorder %s38, %s41
      %p50 = scmp.eq.s32.totalorder %s19, 3
      %p51 = por %p49, %p50
      %p52 = scmp.ne.s32.totalorder %s41, %s42
      %p53 = scmp.eq.s32.totalorder %s19, 0
      %p54 = por %p52, %p53
      %p55 = scmp.ne.s32.totalorder %s41, %s42
      %p56 = scmp.eq.s32.totalorder %s20, 3
      %p57 = por %p55, %p56
      %p59 = scmp.ne.s32.totalorder %s42, %s58
      %p60 = scmp.eq.s32.totalorder %s20, 0
      %p61 = por %p59, %p60
      %s62 = ssub.s32 %s21, %s33
      %s63 = ssub.s32 %s22, %s29
      %s64 = sor.u32 %s62, %s63
      %p65 = scmp.eq.s32.totalorder %s64, 0
      %s67 = sadd.s32 %s66, 1
      %s68 = scalar_select %p65, %s66, %s67
      %p71 = pneg %p65
      %p72 = scmp.eq.s32.totalorder %s14, 3
      %p73 = por %p71, %p72
      %p74 = scmp.ne.s32.totalorder %s66, %s69
      %p75 = scmp.eq.s32.totalorder %s14, 0
      %p76 = por %p74, %p75
      %p77 = scmp.ne.s32.totalorder %s66, %s69
      %p78 = scmp.eq.s32.totalorder %s19, 3
      %p79 = por %p77, %p78
      %p80 = scmp.ne.s32.totalorder %s69, %s70
      %p81 = scmp.eq.s32.totalorder %s19, 0
      %p82 = por %p80, %p81
      %p83 = scmp.ne.s32.totalorder %s69, %s70
      %p84 = scmp.eq.s32.totalorder %s20, 3
      %p85 = por %p83, %p84
      %p87 = scmp.ne.s32.totalorder %s70, %s86
      %p88 = scmp.eq.s32.totalorder %s20, 0
      %p89 = por %p87, %p88
      %s90 = ssub.s32 %s21, %s33
      %p91 = scmp.eq.s32.totalorder %s90, 0
      %s93 = sadd.s32 %s92, 1
      %s94 = scalar_select %p91, %s92, %s93
      %p97 = pneg %p91
      %p98 = scmp.eq.s32.totalorder %s14, 3
      %p99 = por %p97, %p98
      %p100 = scmp.ne.s32.totalorder %s92, %s95
      %p101 = scmp.eq.s32.totalorder %s14, 0
      %p102 = por %p100, %p101
      %p103 = scmp.ne.s32.totalorder %s92, %s95
      %p104 = scmp.eq.s32.totalorder %s19, 3
      %p105 = por %p103, %p104
      %p106 = scmp.ne.s32.totalorder %s95, %s96
      %p107 = scmp.eq.s32.totalorder %s19, 0
      %p108 = por %p106, %p107
      %p109 = scmp.ne.s32.totalorder %s95, %s96
      %p110 = scmp.eq.s32.totalorder %s20, 3
      %p111 = por %p109, %p110
      %p113 = scmp.ne.s32.totalorder %s96, %s112
      %p114 = scmp.eq.s32.totalorder %s20, 0
      %p115 = por %p113, %p114
      %p116 = scmp.le.s32.totalorder 1, %s14
      %p117 = scmp.lt.s32.totalorder %s14, 5
      %p118 = pnand %p116, %p117
      %p119 = pneg %p118
      // Predicated region
      $region9: #{tpu_custom_call.1} parent=5 // pred_check
        _
      $region10: #{tpu_custom_call.1} parent=5 // pred_check_branch
        %121 = sbr.rel (%p118) target = $region12
      $region11: #{tpu_custom_call.1} parent=5 // pred_region
        %s122 = ssub.s32 %s14, 1
      $region12: #{tpu_custom_call.1} parent=5 // pred_fallthru
        _
      %p123 = scmp.lt.s32.totalorder %s14, 4
      // Predicated region
      $region13: #{tpu_custom_call.1} parent=5 // pred_check
        %p124 = pneg %p123
      $region14: #{tpu_custom_call.1} parent=5 // pred_check_branch
        %126 = sbr.rel (%p124) target = $region16
      $region15: #{tpu_custom_call.1} parent=5 // pred_region
        // Predicated region
        $region17: #{tpu_custom_call.1} parent=15 // pred_check
          %p127 = pneg %p48
        $region18: #{tpu_custom_call.1} parent=15 // pred_check_branch
          %129 = sbr.rel (%p127) target = $region20
        $region19: #{tpu_custom_call.1} parent=15 // pred_region
          %s130 = sand.u32 %s38, 1
          %s131 = scalar_lea.sflag [#allocation8], %s130
          %s132 = sand.u32 %s38, 1
          %s133 = smul.addr %s132, 8
          %s134 = scalar_lea.vmem [#allocation7], %s133
          %s136 = ssub.s32 128, 128
          %137 = vsyncadd %s131, %s136
          %s138 = smul.addr %s21, 2
          %s139 = sadd.s32 %s22, %s138
          %s140 = smul.addr %s139, 128
          %s141 = scalar_lea.hbm %s0, %s140
          %s143 = sshll.u32 %s134, 4
          %s144 = int_to_ptr.vmem [resolvable:$true] %s143
          %146 = dma.hbm_to_vmem [thread:$0]  %s141, 128, %s144, %s131
        $region20: #{tpu_custom_call.1} parent=15 // pred_fallthru
          _
        // Predicated region
        $region21: #{tpu_custom_call.1} parent=15 // pred_check
          %p147 = pneg %p76
        $region22: #{tpu_custom_call.1} parent=15 // pred_check_branch
          %149 = sbr.rel (%p147) target = $region24
        $region23: #{tpu_custom_call.1} parent=15 // pred_region
          %s150 = sand.u32 %s66, 1
          %s151 = scalar_lea.sflag [#allocation10], %s150
          %s152 = sand.u32 %s66, 1
          %s153 = smul.addr %s152, 24
          %s154 = scalar_lea.vmem [#allocation9], %s153
          %s156 = ssub.s32 384, 384
          %157 = vsyncadd %s151, %s156
          %s158 = smul.addr %s21, 6
          %s159 = sadd.s32 %s22, %s158
          %s160 = smul.addr %s159, 128
          %s161 = scalar_lea.hbm %s1, %s160
          %s162 = sshll.u32 %s154, 4
          %s163 = int_to_ptr.vmem [resolvable:$true] %s162
          %168 = dma.hbm_to_vmem [thread:$0]  %s161, 384, %s163, %s151, 256, 128, 8
        $region24: #{tpu_custom_call.1} parent=15 // pred_fallthru
          _
      $region16: #{tpu_custom_call.1} parent=5 // pred_fallthru
        _
      %p169 = scmp.le.s32.totalorder 1, %s14
      %p170 = scmp.lt.s32.totalorder %s14, 5
      %p171 = pnand %p169, %p170
      %p172 = pneg %p171
      // Predicated region
      $region25: #{tpu_custom_call.1} parent=5 // pred_check
        _
      $region26: #{tpu_custom_call.1} parent=5 // pred_check_branch
        %174 = sbr.rel (%p171) target = $region28
      $region27: #{tpu_custom_call.1} parent=5 // pred_region
        %s175 = ssub.s32 %s14, 1
        %s176 = sand.u32 %s41, 1
        %s177 = scalar_lea.sflag [#allocation8], %s176
        %s178 = sand.u32 %s41, 1
        %s179 = smul.addr %s178, 8
        %s180 = scalar_lea.vmem [#allocation7], %s179
        // Predicated region
        $region29: #{tpu_custom_call.1} parent=27 // pred_check
          %p181 = pneg %p54
        $region30: #{tpu_custom_call.1} parent=27 // pred_check_branch
          %183 = sbr.rel (%p181) target = $region32
        $region31: #{tpu_custom_call.1} parent=27 // pred_region
          %184 = dma.done %s177, 128
        $region32: #{tpu_custom_call.1} parent=27 // pred_fallthru
          _
        %s185 = sand.u32 %s69, 1
        %s186 = scalar_lea.sflag [#allocation10], %s185
        %s187 = sand.u32 %s69, 1
        %s188 = smul.addr %s187, 24
        %s189 = scalar_lea.vmem [#allocation9], %s188
        // Predicated region
        $region33: #{tpu_custom_call.1} parent=27 // pred_check
          %p190 = pneg %p82
        $region34: #{tpu_custom_call.1} parent=27 // pred_check_branch
          %192 = sbr.rel (%p190) target = $region36
        $region35: #{tpu_custom_call.1} parent=27 // pred_region
          %193 = dma.done %s186, 384
        $region36: #{tpu_custom_call.1} parent=27 // pred_fallthru
          _
        %s194 = sand.u32 %s41, 1
        %s195 = scalar_lea.sflag [#allocation8], %s194
        %s196 = sand.u32 %s41, 1
        %s197 = smul.addr %s196, 8
        %s198 = scalar_lea.vmem [#allocation7], %s197
        %p199 = pneg %p54
        %p200 = pneg %p51
        %s201 = sand.u32 %s69, 1
        %s202 = scalar_lea.sflag [#allocation10], %s201
        %s203 = sand.u32 %s69, 1
        %s204 = smul.addr %s203, 24
        %s205 = scalar_lea.vmem [#allocation9], %s204
        %p206 = pneg %p82
        %p207 = pneg %p79
        %p208 = pneg %p108
        %p209 = pneg %p105
        %p210 = scmp.lt.s32.totalorder %s23, 1
        %s211 = scalar_select %p210, %s23, 1
        %s212 = scalar_lea.vmem %s2, %s211
        %p213 = scmp.lt.s32.totalorder %s23, 1
        %s214 = scalar_select %p213, %s23, 1
        %s215 = scalar_lea.vmem %s2, %s214
        %v216 = vld [vmem:[%s180] sm:$0xff]
        %v217 = vld [vmem:[%s189] sm:$0xff]
        %v218 = vld [vmem:[%s189 + $0x8] sm:$0xff]
        %v219 = vld [vmem:[%s189 + $0x10] sm:$0xff]
        %v220 = vlaneseq
        %v221 = vshrl.u32 %v220, 7
        %p222 = scmp.eq.s32.totalorder %s24, 0
        // Predicated region
        $region37: #{tpu_custom_call.1} parent=27 // pred_check
          %p223 = pneg %p222
        $region38: #{tpu_custom_call.1} parent=27 // pred_check_branch
          %225 = sbr.rel (%p223) target = $region40
        $region39: #{tpu_custom_call.1} parent=27 // pred_region
          %vm226 = vcmask 122880
          %227 = vst.msk [vmem:[#allocation2] sm:$0x1] %vm226, 0.0
          %228 = vst.msk [vmem:[#allocation3] sm:$0x1] %vm226, 0.0
          %229 = vst.msk [vmem:[#allocation4] sm:$0x1] %vm226, 0.0
        $region40: #{tpu_custom_call.1} parent=27 // pred_fallthru
          _
        %vm230 = vcmask 1047680
        %231 = vrot.lane.b32.xlu0 %v216, 16
        %v232 = vpop.permute.xlu0 %231
        %v233 = vsel %vm230, %v232, %v216
        %234 = vrot.lane.b32.xlu0 %v233, 16
        %v235 = vpop.permute.xlu0 %234
        %v236 = vsel %vm230, %v235, %v216
        %238 = vrot.lane.b32.xlu0 %v236, 127
        %v239 = vpop.permute.xlu0 %238
        %v241 = vsub.f32 %v216, %v239
        %v242 = vand.u32 2147483647, %v241
        %243 = vrot.lane.b32.xlu0 %v217, 16
        %v244 = vpop.permute.xlu0 %243
        %v245 = vsel %vm230, %v244, %v217
        %246 = vrot.lane.b32.xlu0 %v218, 16
        %v247 = vpop.permute.xlu0 %246
        %v248 = vsel %vm230, %v247, %v218
        %249 = vrot.lane.b32.xlu0 %v219, 16
        %v250 = vpop.permute.xlu0 %249
        %v251 = vsel %vm230, %v250, %v219
        %252 = vrot.lane.b32.xlu0 %v245, 16
        %v253 = vpop.permute.xlu0 %252
        %254 = vrot.lane.b32.xlu0 %v248, 16
        %v255 = vpop.permute.xlu0 %254
        %256 = vrot.lane.b32.xlu0 %v251, 16
        %v257 = vpop.permute.xlu0 %256
        %v258 = vsel %vm230, %v253, %v217
        %v259 = vsel %vm230, %v255, %v218
        %v260 = vsel %vm230, %v257, %v219
        %264 = vrot.lane.b32.xlu0 %v258, 127
        %v265 = vpop.permute.xlu0 %264
        %266 = vrot.lane.b32.xlu0 %v259, 127
        %v267 = vpop.permute.xlu0 %266
        %268 = vrot.lane.b32.xlu0 %v260, 127
        %v269 = vpop.permute.xlu0 %268
        %v273 = vsub.f32 %v217, %v265
        %v274 = vsub.f32 %v218, %v267
        %v275 = vsub.f32 %v219, %v269
        %v276 = vand.u32 2147483647, %v273
        %v277 = vand.u32 2147483647, %v274
        %v278 = vand.u32 2147483647, %v275
        %vm279 = vcmask 130048
        %v280 = vsel %vm279, %v276, 0.0
        %v281 = vsel %vm279, %v277, 0.0
        %v282 = vadd.f32 %v280, %v281
        %v283 = vsel %vm279, %v278, 0.0
        %v284 = vadd.f32 %v282, %v283
        %v285 = vrcp.pop 3.0
        %v286 = vmul.f32 %v284, %v285
        %v287 = vsub.f32 0.0, %v286
        %v288 = vmul.f32 %v287, 1.442695
        %v289 = vpow.pop %v288
        %v290 = vld [vmem:[#allocation3] sm:$0x1]
        %v291 = vmul.f32 %v242, %v289
        %v292 = vsel %vm279, %v291, 0.0
        %v293 = vrot.slane %v292, 4
        %v294 = vadd.f32 %v292, %v293
        %v295 = vrot.slane %v294, 2
        %v296 = vadd.f32 %v294, %v295
        %v297 = vrot.slane %v296, 1
        %v298 = vadd.f32 %v296, %v297
        %v299 = vadd.f32 %v290, %v298
        %vm300 = vcmask 122880
        %301 = vst.msk [vmem:[#allocation3] sm:$0x1] %vm300, %v299
        %v302 = vrot.slane %v216, 1
        %v303 = vsub.f32 %v216, %v302
        %v304 = vand.u32 2147483647, %v303
        %v305 = vrot.slane %v217, 1
        %v306 = vrot.slane %v218, 1
        %v307 = vrot.slane %v219, 1
        %v308 = vsub.f32 %v217, %v305
        %v309 = vsub.f32 %v218, %v306
        %v310 = vsub.f32 %v219, %v307
        %v311 = vand.u32 2147483647, %v308
        %v312 = vand.u32 2147483647, %v309
        %v313 = vand.u32 2147483647, %v310
        %v314 = vsel %vm279, %v311, 0.0
        %v315 = vsel %vm279, %v312, 0.0
        %v316 = vadd.f32 %v314, %v315
        %v317 = vsel %vm279, %v313, 0.0
        %v318 = vadd.f32 %v316, %v317
        %v319 = vmul.f32 %v318, %v285
        %v320 = vsub.f32 0.0, %v319
        %v321 = vmul.f32 %v320, 1.442695
        %v322 = vpow.pop %v321
        %vm323 = vcmp.lt.s32.totalorder %v221, 7
        %v324 = vsel %vm323, %v322, 0.0
        %v325 = vld [vmem:[#allocation4] sm:$0x1]
        %v326 = vmul.f32 %v304, %v324
        %v327 = vsel %vm279, %v326, 0.0
        %v328 = vrot.slane %v327, 4
        %v329 = vadd.f32 %v327, %v328
        %v330 = vrot.slane %v329, 2
        %v331 = vadd.f32 %v329, %v330
        %v332 = vrot.slane %v331, 1
        %v333 = vadd.f32 %v331, %v332
        %v334 = vadd.f32 %v325, %v333
        %335 = vst.msk [vmem:[#allocation4] sm:$0x1] %vm300, %v334
        %p336 = scmp.gt.s32.totalorder %s24, 0
        // Predicated region
        $region41: #{tpu_custom_call.1} parent=27 // pred_check
          %p337 = pneg %p336
        $region42: #{tpu_custom_call.1} parent=27 // pred_check_branch
          %339 = sbr.rel (%p337) target = $region44
        $region43: #{tpu_custom_call.1} parent=27 // pred_region
          %v340 = vld [vmem:[#allocation5] sm:$0x1]
          %v341 = vsub.f32 %v340, %v216
          %v342 = vand.u32 2147483647, %v341
          %v343 = vld [vmem:[#allocation6] sm:$0x1]
          %v344 = vld [vmem:[#allocation6 + $0x1] sm:$0x1]
          %v345 = vld [vmem:[#allocation6 + $0x2] sm:$0x1]
          %v346 = vsub.f32 %v343, %v217
          %v347 = vsub.f32 %v344, %v218
          %v348 = vsub.f32 %v345, %v219
          %v349 = vand.u32 2147483647, %v346
          %v350 = vand.u32 2147483647, %v347
          %v351 = vand.u32 2147483647, %v348
          %v352 = vsel %vm300, %v349, 0.0
          %v353 = vsel %vm300, %v350, 0.0
          %v354 = vadd.f32 %v352, %v353
          %v355 = vsel %vm300, %v351, 0.0
          %v356 = vadd.f32 %v354, %v355
          %v357 = vmul.f32 %v356, %v285
          %v358 = vsub.f32 0.0, %v357
          %v359 = vmul.f32 %v358, 1.442695
          %v360 = vpow.pop %v359
          %v361 = vld [vmem:[#allocation4] sm:$0x1]
          %v362 = vmul.f32 %v342, %v360
          %v363 = vadd.f32 %v362, 0.0
          %v364 = vadd.f32 %v361, %v363
          %365 = vst.msk [vmem:[#allocation4] sm:$0x1] %vm300, %v364
        $region44: #{tpu_custom_call.1} parent=27 // pred_fallthru
          _
        %v366 = vld [vmem:[#allocation2] sm:$0x1]
        %v367 = vsel %vm279, %v216, 0.0
        %v368 = vrot.slane %v367, 4
        %v369 = vadd.f32 %v367, %v368
        %v370 = vrot.slane %v369, 2
        %v371 = vadd.f32 %v369, %v370
        %v372 = vrot.slane %v371, 1
        %v373 = vadd.f32 %v371, %v372
        %v374 = vadd.f32 %v366, %v373
        %375 = vst.msk [vmem:[#allocation2] sm:$0x1] %vm300, %v374
        %vm376 = vcmask 130055
        %377 = vst.msk [vmem:[#allocation5 - $0x7] sm:$0x80] %vm376, %v216
        %378 = vst.msk [vmem:[#allocation6 - $0x7] sm:$0x80] %vm376, %v217
        %379 = vst.msk [vmem:[#allocation6 - $0x6] sm:$0x80] %vm376, %v218
        %380 = vst.msk [vmem:[#allocation6 - $0x5] sm:$0x80] %vm376, %v219
        %p381 = scmp.eq.s32.totalorder %s24, 1
        // Predicated region
        $region45: #{tpu_custom_call.1} parent=27 // pred_check
          %p382 = pneg %p381
        $region46: #{tpu_custom_call.1} parent=27 // pred_check_branch
          %384 = sbr.rel (%p382) target = $region48
        $region47: #{tpu_custom_call.1} parent=27 // pred_region
          %v385 = vld [vmem:[#allocation2] sm:$0x1]
          %v386 = vsel %vm300, %v385, 0.0
          %387 = vadd.xlane.f32.xlu0 %v386
          %v388 = vpop.xlane.xlu0 %387
          %v389 = vmul.f32 %v388, 0.00390625
          %v390 = vadd.f32 %v389, 1e-05
          %v391 = vand.u32 2147483647, %v390
          %v392 = vrcp.pop %v391
          %v393 = vmul.f32 1.0, %v392
          %v394 = vld [vmem:[#allocation3] sm:$0x1]
          %v395 = vsel %vm300, %v394, 0.0
          %396 = vadd.xlane.f32.xlu0 %v395
          %v397 = vpop.xlane.xlu0 %396
          %v399 = vlaneseq
          %v400 = vshrl.u32 %v399, 7
          %v401 = vsub.s32 0, %v400
          %v402 = vrot.slane %v394, %v401
          %403 = vrot.lane.b32.xlu0 %v402, 113
          %v404 = vpop.permute.xlu0 %403
          %v406 = vsub.f32 %v397, %v404
          %v407 = vmul.f32 %v406, %v393
          %v408 = vld [vmem:[#allocation4] sm:$0x1]
          %v409 = vsel %vm300, %v408, 0.0
          %410 = vadd.xlane.f32.xlu0 %v409
          %v411 = vpop.xlane.xlu0 %410
          %v412 = vmul.f32 %v411, %v393
          %v413 = vadd.f32 %v407, 0.0
          %s414 = vtos %v413
          %v415 = vstv %s414
          %v416 = vmul.f32 %v415, 0.0020833334
          %v417 = vadd.f32 %v412, 0.0
          %s418 = vtos %v417
          %v419 = vstv %s418
          %v420 = vmul.f32 %v419, 0.0020833334
          %v421 = vadd.f32 %v416, %v420
          %vm422 = vcmask 0
          %423 = vst.msk [vmem:[%s215] sm:$0x1] %vm422, %v421
        $region48: #{tpu_custom_call.1} parent=27 // pred_fallthru
          _
        %p424 = scmp.lt.s32.totalorder %s23, 1
        %s425 = scalar_select %p424, %s23, 1
        %s426 = scalar_lea.vmem %s2, %s425
        // Predicated region
        $region49: #{tpu_custom_call.1} parent=27 // pred_check
          %p427 = pneg %p105
        $region50: #{tpu_custom_call.1} parent=27 // pred_check_branch
          %429 = sbr.rel (%p427) target = $region52
        $region51: #{tpu_custom_call.1} parent=27 // pred_region
          _
        $region52: #{tpu_custom_call.1} parent=27 // pred_fallthru
          _
      $region28: #{tpu_custom_call.1} parent=5 // pred_fallthru
        _
      %p430 = scmp.le.s32.totalorder 2, %s14
      // Predicated region
      $region53: #{tpu_custom_call.1} parent=5 // pred_check
        %p431 = pneg %p430
      $region54: #{tpu_custom_call.1} parent=5 // pred_check_branch
        %433 = sbr.rel (%p431) target = $region56
      $region55: #{tpu_custom_call.1} parent=5 // pred_region
        %s434 = ssub.s32 %s14, 2
        // Predicated region
        $region57: #{tpu_custom_call.1} parent=55 // pred_check
          %p435 = pneg %p111
        $region58: #{tpu_custom_call.1} parent=55 // pred_check_branch
          %437 = sbr.rel (%p435) target = $region60
        $region59: #{tpu_custom_call.1} parent=55 // pred_region
          %p438 = scmp.lt.s32.totalorder %s25, 1
          %s439 = scalar_select %p438, %s25, 1
          %s440 = scalar_lea.vmem %s2, %s439
        $region60: #{tpu_custom_call.1} parent=55 // pred_fallthru
          _
      $region56: #{tpu_custom_call.1} parent=5 // pred_fallthru
        _
    $region6: #{tpu_custom_call.1} parent=1 // loop_footer
      %s18 = sadd.s32 1, %s14
    $region7: #{tpu_custom_call.1} parent=1 // loop_footer_branch
      %13 = sbr.rel target = $region3
    $region8: #{tpu_custom_call.1} parent=1 // loop_exit
      _
    %441 = vsyncpa [#allocation8], 1
    %s442 = scalar_lea.sflag [#allocation8], 1
    %443 = vsyncpa %s442, 1
    %444 = vsyncpa [#allocation10], 1
    %s445 = scalar_lea.sflag [#allocation10], 1
    %446 = vsyncpa %s445, 1

</llo_original>
